<compile_context>
chip_gen: v7x
topology: tpu7x:2x2x1
jax: 0.10.0
libtpu: 0.0.40
codegen_flags: <defaults>
</compile_context>

<pallas_src>
import jax
import jax.numpy as jnp
from jax.experimental import pallas as pl
from jax.experimental.pallas import tpu as pltpu

_MIB = 1024 * 1024


# ---------------------------------------------------------------------------
# Kernels
# ---------------------------------------------------------------------------
def _residual_small_kernel(x_ref, w_ref, b_ref, o_ref):
    """Ungridded kernel: everything resident in VMEM (small shapes)."""
    x = x_ref[...]
    acc = jnp.dot(x.astype(w_ref.dtype), w_ref[...],
                  preferred_element_type=jnp.float32)
    o_ref[...] = (acc + b_ref[...] + x.astype(jnp.float32)).astype(o_ref.dtype)


def _residual_wres_kernel(x_ref, w_ref, b_ref, o_ref):
    """Weight-resident kernel (grid over row blocks only).

    x_ref : (tm, Hp) activations in original dtype (single HBM stream; cast to
            the compute dtype on the VPU for the MXU)
    w_ref : (Hp, Hp) weight (compute dtype), constant index_map -> DMA'd once
    b_ref : (1,  Hp) bias (f32)
    o_ref : (tm, Hp) output
    """
    x = x_ref[...]
    acc = jnp.dot(x.astype(w_ref.dtype), w_ref[...],
                  preferred_element_type=jnp.float32)
    o_ref[...] = (acc + b_ref[...] + x.astype(jnp.float32)).astype(o_ref.dtype)


def _residual_ktiled_kernel(x_ref, w_ref, b_ref, r_ref, o_ref, acc_ref):
    """General K-tiled kernel with a f32 VMEM accumulator.

    x_ref : (tm, tk)  activation block for the matmul (compute dtype)
    w_ref : (tk, tn)  weight block (compute dtype)
    b_ref : (1,  tn)  bias block (f32)
    r_ref : (tm, tn)  residual block (same array as x, different blocking)
    o_ref : (tm, tn)  output block
    acc_ref: (tm, tn) f32 accumulator scratch
    """
    k = pl.program_id(2)

    @pl.when(k == 0)
    def _():
        # Fold bias + residual into the accumulator init: no zero pass, and
        # the VPU adds are off the final-K critical path.
        acc_ref[...] = r_ref[...].astype(jnp.float32) + b_ref[...]

    acc_ref[...] += jnp.dot(x_ref[...], w_ref[...],
                            preferred_element_type=jnp.float32)

    @pl.when(k == pl.num_programs(2) - 1)
    def _():
        o_ref[...] = acc_ref[...].astype(o_ref.dtype)


# ---------------------------------------------------------------------------
# Tiling helpers
# ---------------------------------------------------------------------------
def _round_up(x, m):
    return ((x + m - 1) // m) * m


def _cdiv(a, b):
    return -(-a // b)


def _vmem_plan():
    """Return (working-set budget, vmem_limit_bytes, small_vmem?) per chip gen."""
    try:
        cap = int(pltpu.get_tpu_info().vmem_capacity_bytes)
    except Exception:  # unknown part / interpret mode: be conservative
        cap = 64 * _MIB
    if cap <= 96 * _MIB:          # v7x-class: 64 MiB per TensorCore, 2 TCs/chip
        budget, small_vmem = 40 * _MIB, True
    else:                         # v5e / v6e: 128 MiB VMEM, 1 TensorCore
        budget, small_vmem = 88 * _MIB, False
    limit = int(min(cap, budget + 24 * _MIB))
    return budget, limit, small_vmem


def _pick_tm(M, cap_rows, sublane, want_two_blocks):
    tm = min(1024, cap_rows, _round_up(M, sublane))
    if want_two_blocks and M > sublane:      # keep both v7x TensorCores busy
        tm = min(tm, _round_up(_cdiv(M, 2), sublane))
    return max(sublane, (tm // sublane) * sublane)


def _ktiled_bytes(tm, tn, tk, cd_sz, od_sz):
    return (2 * tm * tk * cd_sz      # x (matmul stream), double-buffered
            + 2 * tk * tn * cd_sz    # W
            + 2 * tm * tn * cd_sz    # residual stream
            + 2 * tm * tn * od_sz    # output
            + tm * tn * 4            # f32 accumulator scratch
            + 2 * tn * 4)            # bias


def _ktiled_plan(M, Hp, cd_sz, od_sz, budget, sublane, want_two_m_blocks):
    n_cands = [c for c in (2048, 1024, 512, 256, 128) if Hp % c == 0]
    tm_hi = min(1024, _round_up(M, sublane))
    if want_two_m_blocks and M > sublane:
        tm_hi = min(tm_hi, _round_up(_cdiv(M, 2), sublane))
    tm_cands = sorted({max(sublane, (min(tm_hi, t) // sublane) * sublane)
                       for t in (1024, 768, 512, 384, 256, 128, 64, 32, 16, 8)})
    best = None
    for tm in tm_cands:
        for tn in n_cands:
            for tk in n_cands:
                if _ktiled_bytes(tm, tn, tk, cd_sz, od_sz) > budget:
                    continue
                # Arithmetic-intensity proxy; prefer larger tk (fewer K steps).
                score = (tm * tn) / (tm + tn) + tk * 1e-3
                if best is None or score > best[0]:
                    best = (score, tm, tn, tk)
    if best is None:  # pathological fallback: smallest legal tiles
        return max(sublane, 8), 128, 128
    return best[1], best[2], best[3]


# ---------------------------------------------------------------------------
# Wrapper
# ---------------------------------------------------------------------------
def residual_linear(x, w, b, *, compute_dtype=None, force_ktiled=False):
    """Residual(Linear): out = x @ W + b + x for x of shape (B, S, H).

    compute_dtype: dtype fed to the MXU (e.g. jnp.bfloat16 for production
    hidden sizes). Defaults to x.dtype. Accumulation is always f32; output is
    returned in x.dtype. force_ktiled=True forces the K-tiled layout (the one
    used when the weight does not fit in VMEM); exposed for testing.
    """
    B, S, H = x.shape
    M = B * S
    out_dtype = x.dtype
    if compute_dtype is None:
        compute_dtype = x.dtype

    x2 = x.reshape(M, H)
    cd_sz = jnp.dtype(compute_dtype).itemsize
    od_sz = jnp.dtype(out_dtype).itemsize
    x_sz = jnp.dtype(x.dtype).itemsize
    sublane = {4: 8, 2: 16, 1: 32}.get(min(cd_sz, od_sz, x_sz), 8)

    # ---- small-shape fast path: one ungridded VMEM kernel ------------------
    if (not force_ktiled and (H < 128 or M < 128)
            and (2 * M * H + H * H + H) * 4 <= 4 * _MIB):
        # Minimal alignment padding only (no 3-D grid / accumulator machinery).
        Ms, Hs = _round_up(M, sublane), _round_up(H, 128)
        x_s = x2 if (Ms, Hs) == (M, H) else jnp.pad(x2, ((0, Ms - M), (0, Hs - H)))
        w_s = w if Hs == H else jnp.pad(w, ((0, Hs - H), (0, Hs - H)))
        w_s = w_s if w_s.dtype == compute_dtype else w_s.astype(compute_dtype)
        b_s = (b if Hs == H else jnp.pad(b, (0, Hs - H)))
        b_s = b_s.reshape(1, Hs).astype(jnp.float32)
        out = pl.pallas_call(
            _residual_small_kernel,
            out_shape=jax.ShapeDtypeStruct((Ms, Hs), out_dtype),
        )(x_s, w_s, b_s)
        if (Ms, Hs) != (M, H):
            out = out[:M, :H]
        return out.reshape(B, S, H)

    budget, vmem_limit, small_vmem = _vmem_plan()
    Hp = _round_up(max(H, 128), 128)

    # Padded weight / bias (skip pads/casts that are no-ops).
    w_p = w if Hp == H else jnp.pad(w, ((0, Hp - H), (0, Hp - H)))
    w_c = w_p if w_p.dtype == compute_dtype else w_p.astype(compute_dtype)
    b_p = (b if Hp == H else jnp.pad(b, (0, Hp - H)))
    b_p = b_p.reshape(1, Hp).astype(jnp.float32)

    w_bytes = Hp * Hp * cd_sz
    tm_probe = min(_round_up(M, sublane), 256)
    weight_resident = (not force_ktiled) and (
        2 * w_bytes + 2 * tm_probe * Hp * (x_sz + od_sz) + 2 * Hp * 4 <= budget)

    if weight_resident:
        # ---- weight-resident layout: grid over row blocks only -------------
        row_bytes = 2 * Hp * (x_sz + od_sz)   # dbl-buffered x-in + out per row
        cap_rows = max(sublane, (budget - 2 * w_bytes - 2 * Hp * 4) // row_bytes)
        tm = _pick_tm(M, cap_rows, sublane, small_vmem)
        Mp = _round_up(M, tm)
        x_p = x2 if (Mp, Hp) == (M, H) else jnp.pad(x2, ((0, Mp - M), (0, Hp - H)))

        cost = pl.CostEstimate(
            flops=2 * Mp * Hp * Hp + 2 * Mp * Hp,
            transcendentals=0,
            bytes_accessed=int(Mp * Hp * x_sz       # activations, read once
                               + Hp * Hp * cd_sz    # weight, DMA'd once
                               + Hp * 4             # bias
                               + Mp * Hp * od_sz),  # output
        )
        out_p = pl.pallas_call(
            _residual_wres_kernel,
            out_shape=jax.ShapeDtypeStruct((Mp, Hp), out_dtype),
            grid_spec=pltpu.PrefetchScalarGridSpec(
                num_scalar_prefetch=0,
                grid=(Mp // tm,),
                in_specs=[
                    pl.BlockSpec((tm, Hp), lambda i: (i, 0)),   # activations
                    pl.BlockSpec((Hp, Hp), lambda i: (0, 0)),   # W: constant
                    pl.BlockSpec((1, Hp), lambda i: (0, 0)),    # bias
                ],
                out_specs=pl.BlockSpec((tm, Hp), lambda i: (i, 0)),
            ),
            compiler_params=pltpu.CompilerParams(
                dimension_semantics=("parallel",),
                vmem_limit_bytes=vmem_limit,
            ),
            cost_estimate=cost,
        )(x_p, w_c, b_p)
    else:
        # ---- general K-tiled layout with f32 accumulator --------------------
        tm, tn, tk = _ktiled_plan(M, Hp, cd_sz, od_sz, budget, sublane, small_vmem)
        Mp = _round_up(M, tm)
        x_p = x2 if (Mp, Hp) == (M, H) else jnp.pad(x2, ((0, Mp - M), (0, Hp - H)))
        # One compute-dtype activation array feeds both the matmul stream
        # (blocks (tm, tk) over (i, k)) and the residual stream ((tm, tn) over
        # (i, j)) -> no duplicate wrapper-side activation copy.
        x_c = x_p if x_p.dtype == compute_dtype else x_p.astype(compute_dtype)

        grid = (Mp // tm, Hp // tn, Hp // tk)
        cost = pl.CostEstimate(
            flops=2 * Mp * Hp * Hp + 2 * Mp * Hp,
            transcendentals=0,
            bytes_accessed=int(Mp * Hp * cd_sz * (Hp // tn)    # matmul x re-stream
                               + Hp * Hp * cd_sz * (Mp // tm)  # W re-stream
                               + Mp * Hp * cd_sz               # residual stream
                               + Hp * 4                        # bias
                               + Mp * Hp * od_sz),             # output
        )
        out_p = pl.pallas_call(
            _residual_ktiled_kernel,
            out_shape=jax.ShapeDtypeStruct((Mp, Hp), out_dtype),
            grid_spec=pltpu.PrefetchScalarGridSpec(
                num_scalar_prefetch=0,
                grid=grid,
                in_specs=[
                    pl.BlockSpec((tm, tk), lambda i, j, k: (i, k)),  # matmul x
                    pl.BlockSpec((tk, tn), lambda i, j, k: (k, j)),  # W
                    pl.BlockSpec((1, tn), lambda i, j, k: (0, j)),   # bias
                    pl.BlockSpec((tm, tn), lambda i, j, k: (i, j)),  # residual
                ],
                out_specs=pl.BlockSpec((tm, tn), lambda i, j, k: (i, j)),
                scratch_shapes=[pltpu.VMEM((tm, tn), jnp.float32)],
            ),
            compiler_params=pltpu.CompilerParams(
                dimension_semantics=("parallel", "parallel", "arbitrary"),
                vmem_limit_bytes=vmem_limit,
            ),
            cost_estimate=cost,
        )(x_c, w_c, b_p, x_c)

    if (Mp, Hp) != (M, H):
        out_p = out_p[:M, :H]
    return out_p.reshape(B, S, H)


def residual_linear_ref(x, w, b):
    """Pure-JAX reference: func(x) + x with func = Linear."""
    return (jnp.einsum("bsh,hk->bsk", x, w, precision=jax.lax.Precision.HIGHEST)
            + b[None, None, :] + x)


# ---------------------------------------------------------------------------
# Self-test
# ---------------------------------------------------------------------------
if __name__ == "__main__":
    key = jax.random.PRNGKey(0)

    def make(B, S, H, k):
        kx, kw, kb = jax.random.split(k, 3)
        x = jax.random.normal(kx, (B, S, H), dtype=jnp.float32)
        w = jax.random.normal(kw, (H, H), dtype=jnp.float32) * (1.0 / jnp.sqrt(H))
        b = jax.random.normal(kb, (H,), dtype=jnp.float32) * 0.01
        return x, w, b

    k1, k2, k3 = jax.random.split(key, 3)

    # 1) Toy config (batch=2, seq=8, hidden=32): small-shape ungridded kernel.
    x, w, b = make(2, 8, 32, k1)
    ref = residual_linear_ref(x, w, b)
    out = jax.block_until_ready(residual_linear(x, w, b))
    assert out.shape == x.shape
    assert jnp.allclose(out, ref, atol=1e-4, rtol=1e-4)

    # 2) Weight-resident tiled path (f32 and bf16 MXU compute).
    x, w, b = make(2, 128, 256, k2)
    ref = residual_linear_ref(x, w, b)
    out = jax.block_until_ready(residual_linear(x, w, b))
    assert jnp.allclose(out, ref, atol=2e-2, rtol=2e-2)
    out_bf16 = jax.block_until_ready(
        residual_linear(x, w, b, compute_dtype=jnp.bfloat16))
    assert jnp.allclose(out_bf16, ref, atol=1e-1, rtol=1e-1)

    # 3) K-tiled accumulator path (the layout used when W exceeds VMEM).
    x, w, b = make(2, 128, 512, k3)
    ref = residual_linear_ref(x, w, b)
    out = jax.block_until_ready(residual_linear(x, w, b, force_ktiled=True))
    assert jnp.allclose(out, ref, atol=2e-2, rtol=2e-2)

    print("KERNEL_OK")
</pallas_src>

<mosaic_0001>
module attributes {stable_mosaic.version = 11 : i64} {
  func.func @_residual_small_kernel(%arg0: memref<16x128xf32, #tpu.memory_space<vmem>>, %arg1: memref<128x128xf32, #tpu.memory_space<vmem>>, %arg2: memref<1x128xf32, #tpu.memory_space<vmem>>, %arg3: memref<16x128xf32, #tpu.memory_space<vmem>>) attributes {dimension_semantics = [], scalar_prefetch = 0 : i64, scratch_operands = 0 : i64, tpu.core_type = #tpu.core_type<tc>} {
    %c0 = arith.constant 0 : index
    %c0_0 = arith.constant 0 : index
    %0 = vector.load %arg0[%c0, %c0_0] : memref<16x128xf32, #tpu.memory_space<vmem>>, vector<16x128xf32>
    %c0_1 = arith.constant 0 : index
    %c0_2 = arith.constant 0 : index
    %1 = vector.load %arg1[%c0_1, %c0_2] : memref<128x128xf32, #tpu.memory_space<vmem>>, vector<128x128xf32>
    %cst = arith.constant dense<0.000000e+00> : vector<16x128xf32>
    %2 = tpu.matmul %0, %1, %cst {dimension_numbers = #tpu.dot_dimension_numbers<[1], [0], [0], [1], [0, 0, 1, 1], [], []>} : vector<16x128xf32>, vector<128x128xf32>, vector<16x128xf32> -> vector<16x128xf32>
    %c0_3 = arith.constant 0 : index
    %c0_4 = arith.constant 0 : index
    %3 = vector.load %arg2[%c0_3, %c0_4] : memref<1x128xf32, #tpu.memory_space<vmem>>, vector<1x128xf32>
    %4 = vector.broadcast %3 : vector<1x128xf32> to vector<16x128xf32>
    %5 = arith.addf %2, %4 : vector<16x128xf32>
    %6 = arith.addf %5, %0 : vector<16x128xf32>
    %c0_5 = arith.constant 0 : index
    %c0_6 = arith.constant 0 : index
    %7 = vector.load %arg3[%c0_5, %c0_6] : memref<16x128xf32, #tpu.memory_space<vmem>>, vector<16x128xf32>
    tpu.vector_store %arg3[%c0_5, %c0_6], %6 {strides = array<i32>} : memref<16x128xf32, #tpu.memory_space<vmem>>, vector<16x128xf32>,
    return
  }
}

</mosaic_0001>

<llo_original>
// kernel: tpu_custom_call.1
$region0: #{tpu_custom_call.1}
  #allocation0 [shape = 'u32[]', space=smem, size = 0x4, offset = 0x4, fixed_abs, tag = 'smem constant byte address 0x4 - core index']
  #allocation1 [shape = 'u32[144,128]{1,0:T(1,128)}', space=vmem, size = 0x12000, scoped, tag = 'internal scratch']
  %s0 = inlined_call_operand.hbm [shape: f32[16,128], index: 0, kind: input, shape index: {}]
  %s1 = inlined_call_operand.hbm [shape: f32[128,128], index: 1, kind: input, shape index: {}]
  %s2 = inlined_call_operand.vmem [shape: f32[1,128], index: 2, kind: input, shape index: {}]
  %s3 = inlined_call_operand.hbm [shape: f32[16,128], index: 3, kind: output, shape index: {}]
  %s4 = sld [smem:[#allocation0]]
  $region30: #{tpu_custom_call.1} parent=0
    _
  %s6 = ssub.s32 1, %s4
  %s7 = scalar_select 0, %s6, %s4
  $region1: #{tpu_custom_call.1} parent=0
    #allocation2 [shape = 'u8[8192]{0}', space=vmem, size = 0x2000, scoped, tag = 'input window, operand 0, single buffered']
    #allocation3 [shape = 's32[1]{0}', space=sflag, size = 0x4, scoped, tag = 'scoped memory for tpu_custom_call.1']
    #allocation4 [shape = 's32[1]{0}', space=sflag, size = 0x4, scoped, tag = 'scoped memory for tpu_custom_call.1']
    #allocation5 [shape = 'u8[65536]{0}', space=vmem, size = 0x10000, scoped, tag = 'input window, operand 1, single buffered']
    #allocation6 [shape = 's32[1]{0}', space=sflag, size = 0x4, scoped, tag = 'scoped memory for tpu_custom_call.1']
    #allocation7 [shape = 'u8[8192]{0}', space=vmem, size = 0x2000, scoped, tag = 'output window, operand 0, single buffered']
    %8 = vsyncpa [#allocation3], 0
    %9 = vsyncpa [#allocation6], 0
    %10 = vsyncpa [#allocation4], 0
    // Predicated region
    $region2: #{tpu_custom_call.1} parent=1 // pred_check
      _
    $region3: #{tpu_custom_call.1} parent=1 // pred_check_branch
      %12 = sbr.rel (0) target = $region5
    $region4: #{tpu_custom_call.1} parent=1 // pred_region
      %s14 = ssub.s32 256, 256
      %15 = vsyncadd [#allocation3], %s14
      %s16 = sshll.u32 [#allocation2], 4
      %s17 = int_to_ptr.vmem [resolvable:$true] %s16
      %22 = dma.hbm_to_vmem [thread:$0]  %s0, 256, %s17, [#allocation3], 128, 128, 8
    $region5: #{tpu_custom_call.1} parent=1 // pred_fallthru
      _
    // Predicated region
    $region6: #{tpu_custom_call.1} parent=1 // pred_check
      _
    $region7: #{tpu_custom_call.1} parent=1 // pred_check_branch
      %24 = sbr.rel (0) target = $region9
    $region8: #{tpu_custom_call.1} parent=1 // pred_region
      %s26 = ssub.s32 2048, 2048
      %27 = vsyncadd [#allocation6], %s26
      %s28 = sshll.u32 [#allocation5], 4
      %s29 = int_to_ptr.vmem [resolvable:$true] %s28
      %34 = dma.hbm_to_vmem [thread:$0]  %s1, 2048, %s29, [#allocation6], 128, 128, 8
    $region9: #{tpu_custom_call.1} parent=1 // pred_fallthru
      _
    // Predicated region
    $region10: #{tpu_custom_call.1} parent=1 // pred_check
      _
    $region11: #{tpu_custom_call.1} parent=1 // pred_check_branch
      %36 = sbr.rel (0) target = $region13
    $region12: #{tpu_custom_call.1} parent=1 // pred_region
      _
    $region13: #{tpu_custom_call.1} parent=1 // pred_fallthru
      _
    // Predicated region
    $region14: #{tpu_custom_call.1} parent=1 // pred_check
      _
    $region15: #{tpu_custom_call.1} parent=1 // pred_check_branch
      %38 = sbr.rel (0) target = $region17
    $region16: #{tpu_custom_call.1} parent=1 // pred_region
      %39 = dma.done [#allocation3], 256
    $region17: #{tpu_custom_call.1} parent=1 // pred_fallthru
      _
    // Predicated region
    $region18: #{tpu_custom_call.1} parent=1 // pred_check
      _
    $region19: #{tpu_custom_call.1} parent=1 // pred_check_branch
      %41 = sbr.rel (0) target = $region21
    $region20: #{tpu_custom_call.1} parent=1 // pred_region
      %42 = dma.done [#allocation6], 2048
    $region21: #{tpu_custom_call.1} parent=1 // pred_fallthru
      _
    %v43 = vld [vmem:[#allocation2] sm:$0xff]
    %v44 = vld [vmem:[#allocation2 + $0x8] sm:$0xff]
    %v45 = vld [vmem:[#allocation5] sm:$0xff]
    %v46 = vld [vmem:[#allocation5 + $0x8] sm:$0xff]
    %v47 = vld [vmem:[#allocation5 + $0x10] sm:$0xff]
    %v48 = vld [vmem:[#allocation5 + $0x18] sm:$0xff]
    %v49 = vld [vmem:[#allocation5 + $0x20] sm:$0xff]
    %v50 = vld [vmem:[#allocation5 + $0x28] sm:$0xff]
    %v51 = vld [vmem:[#allocation5 + $0x30] sm:$0xff]
    %v52 = vld [vmem:[#allocation5 + $0x38] sm:$0xff]
    %v53 = vld [vmem:[#allocation5 + $0x40] sm:$0xff]
    %v54 = vld [vmem:[#allocation5 + $0x48] sm:$0xff]
    %v55 = vld [vmem:[#allocation5 + $0x50] sm:$0xff]
    %v56 = vld [vmem:[#allocation5 + $0x58] sm:$0xff]
    %v57 = vld [vmem:[#allocation5 + $0x60] sm:$0xff]
    %v58 = vld [vmem:[#allocation5 + $0x68] sm:$0xff]
    %v59 = vld [vmem:[#allocation5 + $0x70] sm:$0xff]
    %v60 = vld [vmem:[#allocation5 + $0x78] sm:$0xff]
    %v61 = vld [vmem:[%s2] sm:$0x1]
    %v63 = vlaneseq
    %v64 = vshrl.u32 %v63, 7
    %v65 = vsub.s32 0, %v64
    %v66 = vrot.slane %v61, %v65
    %68 = vmatprep.subr.mxu0 0.0
    %69 = vmatpush1.msra.mxu0 %v45
    %70 = vmatprep.subr.mxu0 0.0
    %71 = vmatpush1.msra.mxu0 %v46
    %72 = vmatprep.subr.mxu0 0.0
    %73 = vmatpush1.msra.mxu0 %v47
    %74 = vmatprep.subr.mxu0 0.0
    %75 = vmatpush1.msra.mxu0 %v48
    %76 = vmatprep.subr.mxu0 0.0
    %77 = vmatpush1.msra.mxu0 %v49
    %78 = vmatprep.subr.mxu0 0.0
    %79 = vmatpush1.msra.mxu0 %v50
    %80 = vmatprep.subr.mxu0 0.0
    %81 = vmatpush1.msra.mxu0 %v51
    %82 = vmatprep.subr.mxu0 0.0
    %83 = vmatpush1.msra.mxu0 %v52
    %84 = vmatprep.subr.mxu0 0.0
    %85 = vmatpush1.msra.mxu0 %v53
    %86 = vmatprep.subr.mxu0 0.0
    %87 = vmatpush1.msra.mxu0 %v54
    %88 = vmatprep.subr.mxu0 0.0
    %89 = vmatpush1.msra.mxu0 %v55
    %90 = vmatprep.subr.mxu0 0.0
    %91 = vmatpush1.msra.mxu0 %v56
    %92 = vmatprep.subr.mxu0 0.0
    %93 = vmatpush1.msra.mxu0 %v57
    %94 = vmatprep.subr.mxu0 0.0
    %95 = vmatpush1.msra.mxu0 %v58
    %96 = vmatprep.subr.mxu0 0.0
    %97 = vmatpush1.msra.mxu0 %v59
    %98 = vmatprep.subr.mxu0 0.0
    %99 = vmatpush1.msra.mxu0 %v60
    %100 = vmatprep.subr.mxu0 0.0
    %101 = vmatpush1.msra.mxu0 0.0
    %102 = vmatprep.subr.mxu0 0.0
    %103 = vmatpush1.msra.mxu0 0.0
    %104 = vmatprep.subr.mxu0 0.0
    %105 = vmatpush1.msra.mxu0 0.0
    %106 = vmatprep.subr.mxu0 0.0
    %107 = vmatpush1.msra.mxu0 0.0
    %108 = vmatprep.subr.mxu0 0.0
    %109 = vmatpush1.msra.mxu0 0.0
    %110 = vmatprep.subr.mxu0 0.0
    %111 = vmatpush1.msra.mxu0 0.0
    %112 = vmatprep.subr.mxu0 0.0
    %113 = vmatpush1.msra.mxu0 0.0
    %114 = vmatprep.subr.mxu0 0.0
    %115 = vmatpush1.msra.mxu0 0.0
    %116 = vmatprep.subr.mxu0 0.0
    %117 = vmatpush1.msra.mxu0 0.0
    %118 = vmatprep.subr.mxu0 0.0
    %119 = vmatpush1.msra.mxu0 0.0
    %120 = vmatprep.subr.mxu0 0.0
    %121 = vmatpush1.msra.mxu0 0.0
    %122 = vmatprep.subr.mxu0 0.0
    %123 = vmatpush1.msra.mxu0 0.0
    %124 = vmatprep.subr.mxu0 0.0
    %125 = vmatpush1.msra.mxu0 0.0
    %126 = vmatprep.subr.mxu0 0.0
    %127 = vmatpush1.msra.mxu0 0.0
    %128 = vmatprep.subr.mxu0 0.0
    %129 = vmatpush1.msra.mxu0 0.0
    %130 = vmatprep.subr.mxu0 0.0
    %131 = vmatpush1.msra.mxu0 0.0
    %132 = vmatprep.mubr.f32.mxu0 0.0
    %133 = vmatmul.mubr.f32.gmra.mrb[0].mxu0 %v43
    %v134 = vpop.f32.mrb[0].mxu0
    %v135 = vadd.f32 %v66, %v134
    %v136 = vpop.f32.mrb[0].mxu0
    %137 = vmatprep.mubr.f32.mxu0 0.0
    %138 = vmatmul.mubr.f32.gmra.mrb[0].mxu0 %v44
    %v139 = vpop.f32.mrb[0].mxu0
    %v140 = vadd.f32 %v66, %v139
    %v141 = vpop.f32.mrb[0].mxu0
    %142 = vdwg.mxu0
    %v143 = vadd.f32 %v135, %v43
    %v144 = vadd.f32 %v140, %v44
    %145 = vst [vmem:[#allocation7] sm:$0xff] %v143
    %146 = vst [vmem:[#allocation7 + $0x8] sm:$0xff] %v144
    // Predicated region
    $region22: #{tpu_custom_call.1} parent=1 // pred_check
      _
    $region23: #{tpu_custom_call.1} parent=1 // pred_check_branch
      %148 = sbr.rel (0) target = $region25
    $region24: #{tpu_custom_call.1} parent=1 // pred_region
      %s150 = ssub.s32 256, 256
      %151 = vsyncadd [#allocation4], %s150
      %s152 = sshll.u32 [#allocation7], 4
      %s153 = int_to_ptr.vmem [resolvable:$true] %s152
      %158 = dma.vmem_to_hbm [thread:$0]  %s153, 256, %s3, [#allocation4], 128, 128, 8
    $region25: #{tpu_custom_call.1} parent=1 // pred_fallthru
      _
    // Predicated region
    $region26: #{tpu_custom_call.1} parent=1 // pred_check
      _
    $region27: #{tpu_custom_call.1} parent=1 // pred_check_branch
      %160 = sbr.rel (0) target = $region29
    $region28: #{tpu_custom_call.1} parent=1 // pred_region
      %161 = dma.done [#allocation4], 256
    $region29: #{tpu_custom_call.1} parent=1 // pred_fallthru
      _
    %162 = vsyncpa [#allocation3], 1
    %163 = vsyncpa [#allocation6], 1
    %164 = vsyncpa [#allocation4], 1

</llo_original>
